<compile_context>
chip_gen: v7x
topology: tpu7x:2x2x1
jax: 0.10.0
libtpu: 0.0.40
codegen_flags: <defaults>
</compile_context>

<pallas_src>
import functools

import jax
import jax.numpy as jnp
from jax.experimental import pallas as pl
from jax.experimental.pallas import tpu as pltpu


_MIN_STEP_BYTES = 2 * 1024 * 1024        # target minimum per-grid-step slab (resident path)
_POOL_CHUNK = 1024                       # lane chunk for the in-kernel f32 spatial sum
_DEFAULT_STREAM_TILE = 4 * 1024 * 1024   # per-step x-tile bytes for the streaming path


@functools.lru_cache(maxsize=None)
def _vmem_budgets():
    """(scoped vmem_limit_bytes, resident-path working-set budget), generation aware."""
    cap = None
    try:
        cap = int(getattr(pltpu.get_tpu_info(), "vmem_capacity_bytes", 0)) or None
    except Exception:
        cap = None
    if cap is None:
        cap = 64 * 1024 * 1024                      # conservative default (v7x-sized)
    if cap >= 96 * 1024 * 1024:                     # v5e / v6e: 128 MiB physical VMEM
        return 96 * 1024 * 1024, 72 * 1024 * 1024
    return 44 * 1024 * 1024, 32 * 1024 * 1024       # v7x-class: 64 MiB physical per TC


def _mosaic(sem, vmem_limit):
    return pltpu.CompilerParams(dimension_semantics=sem, vmem_limit_bytes=vmem_limit)


def _pooled_sum_f32(x_ref, hw):
    """Spatial sum over the last axis of a (bn, C, hw) VMEM ref, accumulated in f32
    lane-chunks so sub-f32 dtypes never materialize a full f32 copy of the slab."""
    bn, C = x_ref.shape[0], x_ref.shape[1]
    if hw <= _POOL_CHUNK:
        return jnp.sum(x_ref[...].astype(jnp.float32), axis=-1)

    n_full = hw // _POOL_CHUNK

    def body(i, acc):
        off = pl.multiple_of(i * _POOL_CHUNK, 128)
        xc = x_ref[:, :, pl.ds(off, _POOL_CHUNK)].astype(jnp.float32)
        return acc + jnp.sum(xc, axis=-1)

    acc = jax.lax.fori_loop(0, n_full, body, jnp.zeros((bn, C), jnp.float32))
    rem = hw - n_full * _POOL_CHUNK
    if rem:
        tail = x_ref[:, :, pl.ds(n_full * _POOL_CHUNK, rem)].astype(jnp.float32)
        acc = acc + jnp.sum(tail, axis=-1)
    return acc


def _channel_mlp(pooled, w1_ref, b1_ref, w2_ref, b2_ref):
    """Batched, lane-dense channel MLP: (bn,C) -> ReLU(bn,Cr) -> sigmoid(bn,C)."""
    z = jnp.dot(pooled, w1_ref[...], preferred_element_type=jnp.float32) + b1_ref[...]
    z = jnp.maximum(z, 0.0)
    s = jnp.dot(z, w2_ref[...], preferred_element_type=jnp.float32) + b2_ref[...]
    return jax.nn.sigmoid(s)


def _ca_resident_kernel(x_ref, w1_ref, b1_ref, w2_ref, b2_ref, o_ref, *, inv_hw, hw):
    pooled = _pooled_sum_f32(x_ref, hw) * inv_hw                 # (bn, C) f32 avg pool
    s = _channel_mlp(pooled, w1_ref, b1_ref, w2_ref, b2_ref)     # (bn, C) f32
    x = x_ref[...]                                               # (bn, C, HW) input dtype
    o_ref[...] = (x * s[:, :, None].astype(x.dtype)).astype(o_ref.dtype)


def _ca_pool_mlp_kernel(x_ref, w1_ref, b1_ref, w2_ref, b2_ref, s_ref, acc_ref,
                        *, hw, thw, inv_hw):
    k = pl.program_id(1)
    nk = pl.num_programs(1)

    @pl.when(k == 0)
    def _():
        acc_ref[...] = jnp.zeros_like(acc_ref)

    x = x_ref[...].astype(jnp.float32)                           # (bn, C, thw)
    if hw % thw != 0:
        # Ragged tail: only the LAST spatial tile pays the iota/compare/select.
        @pl.when(k < nk - 1)
        def _():
            acc_ref[...] += jnp.sum(x, axis=-1)

        @pl.when(k == nk - 1)
        def _():
            valid = hw - k * thw
            col = jax.lax.broadcasted_iota(jnp.int32, x.shape, 2)
            acc_ref[...] += jnp.sum(jnp.where(col < valid, x, 0.0), axis=-1)
    else:
        acc_ref[...] += jnp.sum(x, axis=-1)

    @pl.when(k == nk - 1)
    def _():
        mean = acc_ref[...] * inv_hw                             # (bn, C) f32
        s = _channel_mlp(mean, w1_ref, b1_ref, w2_ref, b2_ref)   # (bn, C)
        s_ref[...] = s[:, :, None]                               # (bn, C, 1)


def _ca_scale_kernel(x_ref, s_ref, o_ref):
    x = x_ref[...]                                               # (bn, C, thw) input dtype
    s = s_ref[...].astype(x.dtype)                               # (bn, C, 1), cast once
    o_ref[...] = (x * s).astype(o_ref.dtype)


def _pick_tile(HW, C, itemsize, tile_bytes, N):
    """Pick (bn, thw) so one grid step moves ~tile_bytes of x, thw lane-dense."""
    if HW < 128 or C * HW * itemsize <= tile_bytes:
        thw = HW                                                 # whole spatial extent/step
    else:
        lanes = max(128, (tile_bytes // max(1, C * itemsize)) // 128 * 128)
        thw = min(lanes, (HW // 128) * 128)
    step = C * thw * itemsize
    bn = 1
    if thw == HW and step < tile_bytes:
        bn = max(1, min(N, tile_bytes // max(1, step)))
    return bn, thw


def ca_layer(x, w1, b1, w2, b2, *, force_streaming=False, stream_tile_bytes=None):
    """Channel-attention layer (RCAN CALayer).

    x : (N, C, H, W)
    w1: (C//r, C), b1: (C//r, 1)   -- first 1x1 conv
    w2: (C, C//r), b2: (C, 1)      -- second 1x1 conv
    returns (N, C, H, W) in x.dtype
    """
    N, C, H, W = x.shape
    Cr = w1.shape[0]
    HW = H * W
    itemsize = jnp.dtype(x.dtype).itemsize
    vmem_limit, resident_budget = _vmem_budgets()

    x_flat = x.reshape(N, C, HW)
    # Lane-dense parameter layouts: the channel MLP runs as (bn, C) @ (C, Cr) etc.
    w1t = jnp.transpose(w1.reshape(Cr, C))      # (C, Cr)
    w2t = jnp.transpose(w2.reshape(C, Cr))      # (Cr, C)
    b1r = b1.reshape(1, Cr)
    b2r = b2.reshape(1, C)

    per_image_bytes = C * HW * itemsize
    if not force_streaming and 4 * per_image_bytes <= resident_budget:
        # ---------------- resident-slab path: one pass over x (2x HBM traffic) ----------------
        # Small bn: per-step slab ~>= 2 MiB, but keep >= 2 grid steps when N allows so the
        # input/output double buffers overlap and v7x can shard the batch across its 2 TCs.
        bn = max(1, -(-_MIN_STEP_BYTES // per_image_bytes))      # ceil(2MiB / slab)
        bn = min(bn, N)
        if N >= 2:
            bn = min(bn, (N + 1) // 2)                           # guarantee >= 2 grid steps
        bn = max(1, min(bn, resident_budget // max(1, 4 * per_image_bytes)))

        out_flat = pl.pallas_call(
            functools.partial(_ca_resident_kernel, inv_hw=1.0 / HW, hw=HW),
            out_shape=jax.ShapeDtypeStruct((N, C, HW), x.dtype),
            grid=(pl.cdiv(N, bn),),
            in_specs=[
                pl.BlockSpec((bn, C, HW), lambda n: (n, 0, 0)),
                pl.BlockSpec((C, Cr), lambda n: (0, 0)),
                pl.BlockSpec((1, Cr), lambda n: (0, 0)),
                pl.BlockSpec((Cr, C), lambda n: (0, 0)),
                pl.BlockSpec((1, C), lambda n: (0, 0)),
            ],
            out_specs=pl.BlockSpec((bn, C, HW), lambda n: (n, 0, 0)),
            compiler_params=_mosaic(("parallel",), vmem_limit),
        )(x_flat, w1t, b1r, w2t, b2r)
        return out_flat.reshape(N, C, H, W)

    # ---------------- streaming two-phase path: lane-dense ~4 MiB spatial tiles ----------------
    if stream_tile_bytes is not None:
        p1_bytes = p2_bytes = int(stream_tile_bytes)
    else:
        # Pass 1 casts its tile to f32 for the accumulate; shrink the tile for sub-16-bit
        # dtypes so (2 input buffers + f32 temp) stays well under the scoped limit.
        p1_bytes = _DEFAULT_STREAM_TILE if itemsize >= 2 else _DEFAULT_STREAM_TILE // 2
        p2_bytes = _DEFAULT_STREAM_TILE

    bn1, thw1 = _pick_tile(HW, C, itemsize, p1_bytes, N)
    if N >= 2:
        bn1 = min(bn1, (N + 1) // 2)            # >= 2 batch steps -> v7x megacore on pass 1
    bn2, thw2 = _pick_tile(HW, C, itemsize, p2_bytes, N)

    weight_specs = [
        pl.BlockSpec((C, Cr), lambda n, k: (0, 0)),
        pl.BlockSpec((1, Cr), lambda n, k: (0, 0)),
        pl.BlockSpec((Cr, C), lambda n, k: (0, 0)),
        pl.BlockSpec((1, C), lambda n, k: (0, 0)),
    ]

    # Pass 1: streaming global-avg-pool + channel MLP -> per-image scale (N, C, 1).
    s = pl.pallas_call(
        functools.partial(_ca_pool_mlp_kernel, hw=HW, thw=thw1, inv_hw=1.0 / HW),
        out_shape=jax.ShapeDtypeStruct((N, C, 1), jnp.float32),
        grid=(pl.cdiv(N, bn1), pl.cdiv(HW, thw1)),
        in_specs=[pl.BlockSpec((bn1, C, thw1), lambda n, k: (n, 0, k))] + weight_specs,
        out_specs=pl.BlockSpec((bn1, C, 1), lambda n, k: (n, 0, 0)),
        scratch_shapes=[pltpu.VMEM((bn1, C), jnp.float32)],
        compiler_params=_mosaic(("parallel", "arbitrary"), vmem_limit),
    )(x_flat, w1t, b1r, w2t, b2r)

    # Pass 2: tiled broadcast multiply x * s.
    out_flat = pl.pallas_call(
        _ca_scale_kernel,
        out_shape=jax.ShapeDtypeStruct((N, C, HW), x.dtype),
        grid=(pl.cdiv(N, bn2), pl.cdiv(HW, thw2)),
        in_specs=[
            pl.BlockSpec((bn2, C, thw2), lambda n, k: (n, 0, k)),
            pl.BlockSpec((bn2, C, 1), lambda n, k: (n, 0, 0)),
        ],
        out_specs=pl.BlockSpec((bn2, C, thw2), lambda n, k: (n, 0, k)),
        compiler_params=_mosaic(("parallel", "parallel"), vmem_limit),
    )(x_flat, s)

    return out_flat.reshape(N, C, H, W)


def _reference(x, w1, b1, w2, b2):
    # Pure-JAX reference mirroring the PyTorch forward.
    y = jnp.mean(x, axis=(2, 3), keepdims=True)                 # (N, C, 1, 1)
    y = jnp.einsum("rc,ncab->nrab", w1, y) + b1[None, :, :, None]
    y = jnp.maximum(y, 0.0)
    y = jnp.einsum("cr,nrab->ncab", w2, y) + b2[None, :, :, None]
    y = jax.nn.sigmoid(y)
    return x * y


if __name__ == "__main__":
    key = jax.random.PRNGKey(0)

    def make_inputs(k, N, C, H, W, reduction):
        Cr = max(1, C // reduction)
        ks = jax.random.split(k, 5)
        x = jax.random.normal(ks[0], (N, C, H, W), dtype=jnp.float32)
        w1 = jax.random.normal(ks[1], (Cr, C), dtype=jnp.float32) * 0.1
        b1 = jax.random.normal(ks[2], (Cr, 1), dtype=jnp.float32) * 0.1
        w2 = jax.random.normal(ks[3], (C, Cr), dtype=jnp.float32) * 0.1
        b2 = jax.random.normal(ks[4], (C, 1), dtype=jnp.float32) * 0.1
        return x, w1, b1, w2, b2

    k1, k2, k3 = jax.random.split(key, 3)

    # Case 1: small feature map -> resident-slab path (bn=1, two pipelined grid steps).
    args1 = make_inputs(k1, 2, 32, 8, 8, 4)
    out1 = jax.block_until_ready(ca_layer(*args1))
    assert out1.shape == args1[0].shape
    assert jnp.allclose(out1, _reference(*args1), atol=1e-5, rtol=1e-5), "resident path mismatch"

    # Case 2: resident path with HW > chunk -> exercises the chunked f32 pooling loop
    # (HW = 2304 = 2 x 1024 + 256 remainder).
    args2 = make_inputs(k2, 1, 8, 48, 48, 4)
    out2 = jax.block_until_ready(ca_layer(*args2))
    assert jnp.allclose(out2, _reference(*args2), atol=1e-5, rtol=1e-5), "chunked resident mismatch"

    # Case 3: force the streaming two-phase path (full-HW tile per step).
    args3 = make_inputs(k3, 2, 16, 12, 25, 4)
    out3 = jax.block_until_ready(ca_layer(*args3, force_streaming=True))
    assert jnp.allclose(out3, _reference(*args3), atol=1e-5, rtol=1e-5), "streaming path mismatch"

    # Case 4: streaming path with small forced tiles -> ragged last spatial tile
    # (HW = 300 -> 128/128/44-lane tiles, masked tail only on the last tile).
    out4 = jax.block_until_ready(
        ca_layer(*args3, force_streaming=True, stream_tile_bytes=8192))
    assert jnp.allclose(out4, _reference(*args3), atol=1e-5, rtol=1e-5), "ragged streaming mismatch"

    print("KERNEL_OK")
</pallas_src>

<mosaic_0001>
module attributes {stable_mosaic.version = 11 : i64} {
  func.func @_ca_resident_kernel(%arg0: i32, %arg1: memref<1x32x64xf32, #tpu.memory_space<vmem>>, %arg2: memref<32x8xf32, #tpu.memory_space<vmem>>, %arg3: memref<1x8xf32, #tpu.memory_space<vmem>>, %arg4: memref<8x32xf32, #tpu.memory_space<vmem>>, %arg5: memref<1x32xf32, #tpu.memory_space<vmem>>, %arg6: memref<1x32x64xf32, #tpu.memory_space<vmem>>) attributes {dimension_semantics = [#tpu.dimension_semantics<parallel>], iteration_bounds = array<i64: 2>, scalar_prefetch = 0 : i64, scratch_operands = 0 : i64, tpu.core_type = #tpu.core_type<tc>, window_params = [{transform_indices = @transform_0, window_bounds = array<i64: 1, 32, 64>}, {pipeline_mode = #tpu.pipeline_mode<synchronous>, transform_indices = @transform_1, window_bounds = array<i64: 32, 8>}, {pipeline_mode = #tpu.pipeline_mode<synchronous>, transform_indices = @transform_2, window_bounds = array<i64: 1, 8>}, {pipeline_mode = #tpu.pipeline_mode<synchronous>, transform_indices = @transform_3, window_bounds = array<i64: 8, 32>}, {pipeline_mode = #tpu.pipeline_mode<synchronous>, transform_indices = @transform_4, window_bounds = array<i64: 1, 32>}, {transform_indices = @transform_5, window_bounds = array<i64: 1, 32, 64>}]} {
    %c0 = arith.constant 0 : index
    %c0_0 = arith.constant 0 : index
    %c0_1 = arith.constant 0 : index
    %0 = vector.load %arg1[%c0, %c0_0, %c0_1] : memref<1x32x64xf32, #tpu.memory_space<vmem>>, vector<1x32x64xf32>
    %cst = arith.constant dense<0.000000e+00> : vector<1x32xf32>
    %1 = vector.multi_reduction <add>, %0, %cst [2] : vector<1x32x64xf32> to vector<1x32xf32>
    %cst_2 = arith.constant 1.562500e-02 : f32
    %2 = vector.broadcast %cst_2 : f32 to vector<1x32xf32>
    %3 = arith.mulf %1, %2 : vector<1x32xf32>
    %c0_3 = arith.constant 0 : index
    %c0_4 = arith.constant 0 : index
    %4 = vector.load %arg2[%c0_3, %c0_4] : memref<32x8xf32, #tpu.memory_space<vmem>>, vector<32x8xf32>
    %cst_5 = arith.constant dense<0.000000e+00> : vector<1x8xf32>
    %5 = tpu.matmul %3, %4, %cst_5 {dimension_numbers = #tpu.dot_dimension_numbers<[1], [0], [0], [1], [0, 0, 1, 1], [], []>} : vector<1x32xf32>, vector<32x8xf32>, vector<1x8xf32> -> vector<1x8xf32>
    %c0_6 = arith.constant 0 : index
    %c0_7 = arith.constant 0 : index
    %6 = vector.load %arg3[%c0_6, %c0_7] : memref<1x8xf32, #tpu.memory_space<vmem>>, vector<1x8xf32>
    %7 = arith.addf %5, %6 : vector<1x8xf32>
    %cst_8 = arith.constant 0.000000e+00 : f32
    %8 = vector.broadcast %cst_8 : f32 to vector<1x8xf32>
    %9 = arith.maximumf %7, %8 : vector<1x8xf32>
    %c0_9 = arith.constant 0 : index
    %c0_10 = arith.constant 0 : index
    %10 = vector.load %arg4[%c0_9, %c0_10] : memref<8x32xf32, #tpu.memory_space<vmem>>, vector<8x32xf32>
    %cst_11 = arith.constant dense<0.000000e+00> : vector<1x32xf32>
    %11 = tpu.matmul %9, %10, %cst_11 {dimension_numbers = #tpu.dot_dimension_numbers<[1], [0], [0], [1], [0, 0, 1, 1], [], []>} : vector<1x8xf32>, vector<8x32xf32>, vector<1x32xf32> -> vector<1x32xf32>
    %c0_12 = arith.constant 0 : index
    %c0_13 = arith.constant 0 : index
    %12 = vector.load %arg5[%c0_12, %c0_13] : memref<1x32xf32, #tpu.memory_space<vmem>>, vector<1x32xf32>
    %13 = arith.addf %11, %12 : vector<1x32xf32>
    %14 = arith.negf %13 : vector<1x32xf32>
    %15 = math.exp %14 : vector<1x32xf32>
    %cst_14 = arith.constant 1.000000e+00 : f32
    %16 = vector.broadcast %cst_14 : f32 to vector<1x32xf32>
    %17 = arith.addf %16, %15 : vector<1x32xf32>
    %18 = arith.divf %16, %17 : vector<1x32xf32>
    %c0_15 = arith.constant 0 : index
    %c0_16 = arith.constant 0 : index
    %c0_17 = arith.constant 0 : index
    %19 = vector.load %arg1[%c0_15, %c0_16, %c0_17] : memref<1x32x64xf32, #tpu.memory_space<vmem>>, vector<1x32x64xf32>
    %20 = vector.shape_cast %18 : vector<1x32xf32> to vector<1x32x1xf32>
    %21 = vector.broadcast %20 : vector<1x32x1xf32> to vector<1x32x64xf32>
    %22 = arith.mulf %19, %21 : vector<1x32x64xf32>
    %c0_18 = arith.constant 0 : index
    %c0_19 = arith.constant 0 : index
    %c0_20 = arith.constant 0 : index
    %23 = vector.load %arg6[%c0_18, %c0_19, %c0_20] : memref<1x32x64xf32, #tpu.memory_space<vmem>>, vector<1x32x64xf32>
    tpu.vector_store %arg6[%c0_18, %c0_19, %c0_20], %22 {strides = array<i32>} : memref<1x32x64xf32, #tpu.memory_space<vmem>>, vector<1x32x64xf32>,
    return
  }
  func.func @transform_0(%arg0: i32) -> (i32, i32, i32) {
    %c0_i32 = arith.constant 0 : i32
    %c0_i32_0 = arith.constant 0 : i32
    %c0_i32_1 = arith.constant 0 : i32
    return %arg0, %c0_i32, %c0_i32_0 : i32, i32, i32
  }
  func.func @transform_1(%arg0: i32) -> (i32, i32) {
    %c0_i32 = arith.constant 0 : i32
    %c0_i32_0 = arith.constant 0 : i32
    %c0_i32_1 = arith.constant 0 : i32
    return %c0_i32, %c0_i32_0 : i32, i32
  }
  func.func @transform_2(%arg0: i32) -> (i32, i32) {
    %c0_i32 = arith.constant 0 : i32
    %c0_i32_0 = arith.constant 0 : i32
    %c0_i32_1 = arith.constant 0 : i32
    return %c0_i32, %c0_i32_0 : i32, i32
  }
  func.func @transform_3(%arg0: i32) -> (i32, i32) {
    %c0_i32 = arith.constant 0 : i32
    %c0_i32_0 = arith.constant 0 : i32
    %c0_i32_1 = arith.constant 0 : i32
    return %c0_i32, %c0_i32_0 : i32, i32
  }
  func.func @transform_4(%arg0: i32) -> (i32, i32) {
    %c0_i32 = arith.constant 0 : i32
    %c0_i32_0 = arith.constant 0 : i32
    %c0_i32_1 = arith.constant 0 : i32
    return %c0_i32, %c0_i32_0 : i32, i32
  }
  func.func @transform_5(%arg0: i32) -> (i32, i32, i32) {
    %c0_i32 = arith.constant 0 : i32
    %c0_i32_0 = arith.constant 0 : i32
    %c0_i32_1 = arith.constant 0 : i32
    return %arg0, %c0_i32, %c0_i32_0 : i32, i32, i32
  }
}

</mosaic_0001>

<llo_original>
// kernel: tpu_custom_call.1
$region0: #{tpu_custom_call.1}
  #allocation0 [shape = 'u32[]', space=smem, size = 0x4, offset = 0x4, fixed_abs, tag = 'smem constant byte address 0x4 - core index']
  #allocation1 [shape = 'u32[144,128]{1,0:T(1,128)}', space=vmem, size = 0x12000, scoped, tag = 'internal scratch']
  %s0 = inlined_call_operand.hbm [shape: f32[2,32,64], index: 0, kind: input, shape index: {}]
  %s1 = inlined_call_operand.vmem [shape: f32[32,8], index: 1, kind: input, shape index: {}]
  %s2 = inlined_call_operand.vmem [shape: f32[1,8], index: 2, kind: input, shape index: {}]
  %s3 = inlined_call_operand.vmem [shape: f32[8,32], index: 3, kind: input, shape index: {}]
  %s4 = inlined_call_operand.vmem [shape: f32[1,32], index: 4, kind: input, shape index: {}]
  %s5 = inlined_call_operand.hbm [shape: f32[2,32,64], index: 5, kind: output, shape index: {}]
  %s6 = sld [smem:[#allocation0]]
  $region57: #{tpu_custom_call.1} parent=0
    _
  %s8 = ssub.s32 1, %s6
  %s9 = scalar_select 0, %s8, %s6
  $region1: #{tpu_custom_call.1} parent=0
    #allocation2 [shape = 'u8[32768]{0}', space=vmem, size = 0x8000, scoped, tag = 'input window, operand 0']
    #allocation3 [shape = 's32[2]{0}', space=sflag, size = 0x8, scoped, tag = 'scoped memory for tpu_custom_call.1']
    #allocation4 [shape = 's32[2]{0}', space=sflag, size = 0x8, scoped, tag = 'scoped memory for tpu_custom_call.1']
    #allocation5 [shape = 'u8[32768]{0}', space=vmem, size = 0x8000, scoped, tag = 'output window, operand 0']
    %10 = vsyncpa [#allocation3], 0
    %s11 = scalar_lea.sflag [#allocation3], 1
    %12 = vsyncpa %s11, 0
    %13 = vsyncpa [#allocation4], 0
    %s14 = scalar_lea.sflag [#allocation4], 1
    %15 = vsyncpa %s14, 0
    loop: start=0, step=1, limit=4
    $region2: #{tpu_custom_call.1} parent=1 // loop_pre_header
      _
    $region3: #{tpu_custom_call.1} parent=1 // loop_header
      %s17 = sphi 0, %s21
      %p18 = scmp.ge.s32.totalorder %s17, 4
      %s27 = sphi 0, %s29
      %s30 = sphi 0, %s27
      %s31 = sphi 0, %s30
      %s47 = sphi 0, %s31
      %s51 = sphi 0, %s51
      %s53 = sphi 0, %s51
      %s54 = sphi 0, %s53
      %s68 = sphi 0, %s54
      %s72 = sphi 0, %s72
      %s74 = sphi 0, %s72
      %s75 = sphi 0, %s74
      %s89 = sphi 0, %s75
      %s93 = sphi 0, %s93
      %s95 = sphi 0, %s93
      %s96 = sphi 0, %s95
      %s110 = sphi 0, %s96
      %s114 = sphi 0, %s114
      %s116 = sphi 0, %s114
      %s117 = sphi 0, %s116
      %s131 = sphi 0, %s117
      %s137 = sphi 0, %s139
      %s140 = sphi 0, %s137
      %s141 = sphi 0, %s140
      %s157 = sphi 0, %s141
    $region4: #{tpu_custom_call.1} parent=1 // loop_header_branch
      %20 = sbr.rel (%p18) target = $region8
    $region5: #{tpu_custom_call.1} parent=1 // loop_body
      %s22 = ssub.s32 %s17, 1
      %s23 = ssub.s32 %s17, 2
      %s24 = sadd.s32 %s17, 1
      %s25 = ssub.s32 %s17, %s24
      %p26 = scmp.eq.s32.totalorder %s25, 0
      %s28 = sadd.s32 %s27, 1
      %s29 = scalar_select %p26, %s27, %s28
      %p32 = pneg %p26
      %p33 = scmp.eq.s32.totalorder %s17, 1
      %p34 = por %p32, %p33
      %p35 = scmp.ne.s32.totalorder %s27, %s30
      %p36 = scmp.eq.s32.totalorder %s17, 0
      %p37 = por %p35, %p36
      %p38 = scmp.ne.s32.totalorder %s27, %s30
      %p39 = scmp.eq.s32.totalorder %s22, 1
      %p40 = por %p38, %p39
      %p41 = scmp.ne.s32.totalorder %s30, %s31
      %p42 = scmp.eq.s32.totalorder %s22, 0
      %p43 = por %p41, %p42
      %p44 = scmp.ne.s32.totalorder %s30, %s31
      %p45 = scmp.eq.s32.totalorder %s23, 1
      %p46 = por %p44, %p45
      %p48 = scmp.ne.s32.totalorder %s31, %s47
      %p49 = scmp.eq.s32.totalorder %s23, 0
      %p50 = por %p48, %p49
      %s52 = sadd.s32 %s51, 1
      %p55 = scmp.eq.s32.totalorder %s17, 1
      %p56 = scmp.ne.s32.totalorder %s51, %s53
      %p57 = scmp.eq.s32.totalorder %s17, 0
      %p58 = por %p56, %p57
      %p59 = scmp.ne.s32.totalorder %s51, %s53
      %p60 = scmp.eq.s32.totalorder %s22, 1
      %p61 = por %p59, %p60
      %p62 = scmp.ne.s32.totalorder %s53, %s54
      %p63 = scmp.eq.s32.totalorder %s22, 0
      %p64 = por %p62, %p63
      %p65 = scmp.ne.s32.totalorder %s53, %s54
      %p66 = scmp.eq.s32.totalorder %s23, 1
      %p67 = por %p65, %p66
      %p69 = scmp.ne.s32.totalorder %s54, %s68
      %p70 = scmp.eq.s32.totalorder %s23, 0
      %p71 = por %p69, %p70
      %s73 = sadd.s32 %s72, 1
      %p76 = scmp.eq.s32.totalorder %s17, 1
      %p77 = scmp.ne.s32.totalorder %s72, %s74
      %p78 = scmp.eq.s32.totalorder %s17, 0
      %p79 = por %p77, %p78
      %p80 = scmp.ne.s32.totalorder %s72, %s74
      %p81 = scmp.eq.s32.totalorder %s22, 1
      %p82 = por %p80, %p81
      %p83 = scmp.ne.s32.totalorder %s74, %s75
      %p84 = scmp.eq.s32.totalorder %s22, 0
      %p85 = por %p83, %p84
      %p86 = scmp.ne.s32.totalorder %s74, %s75
      %p87 = scmp.eq.s32.totalorder %s23, 1
      %p88 = por %p86, %p87
      %p90 = scmp.ne.s32.totalorder %s75, %s89
      %p91 = scmp.eq.s32.totalorder %s23, 0
      %p92 = por %p90, %p91
      %s94 = sadd.s32 %s93, 1
      %p97 = scmp.eq.s32.totalorder %s17, 1
      %p98 = scmp.ne.s32.totalorder %s93, %s95
      %p99 = scmp.eq.s32.totalorder %s17, 0
      %p100 = por %p98, %p99
      %p101 = scmp.ne.s32.totalorder %s93, %s95
      %p102 = scmp.eq.s32.totalorder %s22, 1
      %p103 = por %p101, %p102
      %p104 = scmp.ne.s32.totalorder %s95, %s96
      %p105 = scmp.eq.s32.totalorder %s22, 0
      %p106 = por %p104, %p105
      %p107 = scmp.ne.s32.totalorder %s95, %s96
      %p108 = scmp.eq.s32.totalorder %s23, 1
      %p109 = por %p107, %p108
      %p111 = scmp.ne.s32.totalorder %s96, %s110
      %p112 = scmp.eq.s32.totalorder %s23, 0
      %p113 = por %p111, %p112
      %s115 = sadd.s32 %s114, 1
      %p118 = scmp.eq.s32.totalorder %s17, 1
      %p119 = scmp.ne.s32.totalorder %s114, %s116
      %p120 = scmp.eq.s32.totalorder %s17, 0
      %p121 = por %p119, %p120
      %p122 = scmp.ne.s32.totalorder %s114, %s116
      %p123 = scmp.eq.s32.totalorder %s22, 1
      %p124 = por %p122, %p123
      %p125 = scmp.ne.s32.totalorder %s116, %s117
      %p126 = scmp.eq.s32.totalorder %s22, 0
      %p127 = por %p125, %p126
      %p128 = scmp.ne.s32.totalorder %s116, %s117
      %p129 = scmp.eq.s32.totalorder %s23, 1
      %p130 = por %p128, %p129
      %p132 = scmp.ne.s32.totalorder %s117, %s131
      %p133 = scmp.eq.s32.totalorder %s23, 0
      %p134 = por %p132, %p133
      %s135 = ssub.s32 %s17, %s24
      %p136 = scmp.eq.s32.totalorder %s135, 0
      %s138 = sadd.s32 %s137, 1
      %s139 = scalar_select %p136, %s137, %s138
      %p142 = pneg %p136
      %p143 = scmp.eq.s32.totalorder %s17, 1
      %p144 = por %p142, %p143
      %p145 = scmp.ne.s32.totalorder %s137, %s140
      %p146 = scmp.eq.s32.totalorder %s17, 0
      %p147 = por %p145, %p146
      %p148 = scmp.ne.s32.totalorder %s137, %s140
      %p149 = scmp.eq.s32.totalorder %s22, 1
      %p150 = por %p148, %p149
      %p151 = scmp.ne.s32.totalorder %s140, %s141
      %p152 = scmp.eq.s32.totalorder %s22, 0
      %p153 = por %p151, %p152
      %p154 = scmp.ne.s32.totalorder %s140, %s141
      %p155 = scmp.eq.s32.totalorder %s23, 1
      %p156 = por %p154, %p155
      %p158 = scmp.ne.s32.totalorder %s141, %s157
      %p159 = scmp.eq.s32.totalorder %s23, 0
      %p160 = por %p158, %p159
      %p161 = scmp.le.s32.totalorder 1, %s17
      %p162 = scmp.lt.s32.totalorder %s17, 3
      %p163 = pnand %p161, %p162
      %p164 = pneg %p163
      // Predicated region
      $region9: #{tpu_custom_call.1} parent=5 // pred_check
        _
      $region10: #{tpu_custom_call.1} parent=5 // pred_check_branch
        %166 = sbr.rel (%p163) target = $region12
      $region11: #{tpu_custom_call.1} parent=5 // pred_region
        %s167 = ssub.s32 %s17, 1
        // Predicated region
        $region13: #{tpu_custom_call.1} parent=11 // pred_check
          %p168 = pneg %p64
        $region14: #{tpu_custom_call.1} parent=11 // pred_check_branch
          %170 = sbr.rel (%p168) target = $region16
        $region15: #{tpu_custom_call.1} parent=11 // pred_region
          _
        $region16: #{tpu_custom_call.1} parent=11 // pred_fallthru
          _
        // Predicated region
        $region17: #{tpu_custom_call.1} parent=11 // pred_check
          %p171 = pneg %p85
        $region18: #{tpu_custom_call.1} parent=11 // pred_check_branch
          %173 = sbr.rel (%p171) target = $region20
        $region19: #{tpu_custom_call.1} parent=11 // pred_region
          _
        $region20: #{tpu_custom_call.1} parent=11 // pred_fallthru
          _
        // Predicated region
        $region21: #{tpu_custom_call.1} parent=11 // pred_check
          %p174 = pneg %p106
        $region22: #{tpu_custom_call.1} parent=11 // pred_check_branch
          %176 = sbr.rel (%p174) target = $region24
        $region23: #{tpu_custom_call.1} parent=11 // pred_region
          _
        $region24: #{tpu_custom_call.1} parent=11 // pred_fallthru
          _
        // Predicated region
        $region25: #{tpu_custom_call.1} parent=11 // pred_check
          %p177 = pneg %p127
        $region26: #{tpu_custom_call.1} parent=11 // pred_check_branch
          %179 = sbr.rel (%p177) target = $region28
        $region27: #{tpu_custom_call.1} parent=11 // pred_region
          _
        $region28: #{tpu_custom_call.1} parent=11 // pred_fallthru
          _
      $region12: #{tpu_custom_call.1} parent=5 // pred_fallthru
        _
      %p180 = scmp.lt.s32.totalorder %s17, 2
      // Predicated region
      $region29: #{tpu_custom_call.1} parent=5 // pred_check
        %p181 = pneg %p180
      $region30: #{tpu_custom_call.1} parent=5 // pred_check_branch
        %183 = sbr.rel (%p181) target = $region32
      $region31: #{tpu_custom_call.1} parent=5 // pred_region
        // Predicated region
        $region33: #{tpu_custom_call.1} parent=31 // pred_check
          %p184 = pneg %p37
        $region34: #{tpu_custom_call.1} parent=31 // pred_check_branch
          %186 = sbr.rel (%p184) target = $region36
        $region35: #{tpu_custom_call.1} parent=31 // pred_region
          %s187 = sand.u32 %s27, 1
          %s188 = scalar_lea.sflag [#allocation3], %s187
          %s189 = sand.u32 %s27, 1
          %s190 = smul.addr %s189, 32
          %s191 = scalar_lea.vmem [#allocation2], %s190
          %s193 = ssub.s32 512, 512
          %194 = vsyncadd %s188, %s193
          %s195 = smul.addr %s17, 4
          %s196 = smul.addr %s195, 128
          %s197 = scalar_lea.hbm %s0, %s196
          %s198 = sshll.u32 %s191, 4
          %s199 = int_to_ptr.vmem [resolvable:$true] %s198
          %204 = dma.hbm_to_vmem [thread:$0]  %s197, 512, %s199, %s188, 128, 128, 8
        $region36: #{tpu_custom_call.1} parent=31 // pred_fallthru
          _
      $region32: #{tpu_custom_call.1} parent=5 // pred_fallthru
        _
      %p205 = scmp.le.s32.totalorder 1, %s17
      %p206 = scmp.lt.s32.totalorder %s17, 3
      %p207 = pnand %p205, %p206
      %p208 = pneg %p207
      // Predicated region
      $region37: #{tpu_custom_call.1} parent=5 // pred_check
        _
      $region38: #{tpu_custom_call.1} parent=5 // pred_check_branch
        %210 = sbr.rel (%p207) target = $region40
      $region39: #{tpu_custom_call.1} parent=5 // pred_region
        %s211 = ssub.s32 %s17, 1
        %s212 = sand.u32 %s30, 1
        %s213 = scalar_lea.sflag [#allocation3], %s212
        %s214 = sand.u32 %s30, 1
        %s215 = smul.addr %s214, 32
        %s216 = scalar_lea.vmem [#allocation2], %s215
        // Predicated region
        $region41: #{tpu_custom_call.1} parent=39 // pred_check
          %p217 = pneg %p43
        $region42: #{tpu_custom_call.1} parent=39 // pred_check_branch
          %219 = sbr.rel (%p217) target = $region44
        $region43: #{tpu_custom_call.1} parent=39 // pred_region
          %220 = dma.done %s213, 512
        $region44: #{tpu_custom_call.1} parent=39 // pred_fallthru
          _
        %s221 = sand.u32 %s30, 1
        %s222 = scalar_lea.sflag [#allocation3], %s221
        %s223 = sand.u32 %s30, 1
        %s224 = smul.addr %s223, 32
        %s225 = scalar_lea.vmem [#allocation2], %s224
        %p226 = pneg %p43
        %p227 = pneg %p40
        %p228 = pneg %p64
        %p229 = pneg %p61
        %p230 = pneg %p85
        %p231 = pneg %p82
        %p232 = pneg %p106
        %p233 = pneg %p103
        %p234 = pneg %p127
        %p235 = pneg %p124
        %p236 = pneg %p153
        %p237 = pneg %p150
        %s238 = sand.u32 %s140, 1
        %s239 = scalar_lea.sflag [#allocation4], %s238
        %s240 = sand.u32 %s140, 1
        %s241 = smul.addr %s240, 32
        %s242 = scalar_lea.vmem [#allocation5], %s241
        %v243 = vld [vmem:[%s216] sm:$0xff]
        %v244 = vld [vmem:[%s216 + $0x8] sm:$0xff]
        %v245 = vld [vmem:[%s216 + $0x10] sm:$0xff]
        %v246 = vld [vmem:[%s216 + $0x18] sm:$0xff]
        %vm247 = vcmask 523264
        %v248 = vsel %vm247, %v243, 0.0
        %249 = vadd.xlane.f32.xlu0 %v248
        %v250 = vpop.xlane.xlu0 %249
        %v251 = vsel %vm247, %v244, 0.0
        %252 = vadd.xlane.f32.xlu0 %v251
        %v253 = vpop.xlane.xlu0 %252
        %v254 = vsel %vm247, %v245, 0.0
        %255 = vadd.xlane.f32.xlu0 %v254
        %v256 = vpop.xlane.xlu0 %255
        %v257 = vsel %vm247, %v246, 0.0
        %258 = vadd.xlane.f32.xlu0 %v257
        %v259 = vpop.xlane.xlu0 %258
        %v260 = vmul.f32 %v250, 0.015625
        %v261 = vmul.f32 %v253, 0.015625
        %v262 = vmul.f32 %v256, 0.015625
        %v263 = vmul.f32 %v259, 0.015625
        %v264 = vld [vmem:[%s1] sm:$0xff]
        %v265 = vld [vmem:[%s1 + $0x8] sm:$0xff]
        %v266 = vld [vmem:[%s1 + $0x10] sm:$0xff]
        %v267 = vld [vmem:[%s1 + $0x18] sm:$0xff]
        %v268 = vld [vmem:[%s2] sm:$0x1]
        %v273 = vlaneseq
        %v274 = vand.u32 %v273, 127
        %v275 = vlaneseq
        %v276 = vshrl.u32 %v275, 7
        %v277 = vsub.s32 %v274, %v276
        %v278 = vrot.slane %v260, %v277
        %v279 = vadd.s32 %v274, 4294967288
        %v280 = vlaneseq
        %v281 = vshrl.u32 %v280, 7
        %v282 = vsub.s32 %v279, %v281
        %v283 = vrot.slane %v261, %v282
        %vm284 = vcmask 130112
        %v285 = vsel %vm284, %v283, %v278
        %v286 = vadd.s32 %v274, 4294967280
        %v287 = vlaneseq
        %v288 = vshrl.u32 %v287, 7
        %v289 = vsub.s32 %v286, %v288
        %v290 = vrot.slane %v262, %v289
        %vm291 = vcmask 195712
        %v292 = vsel %vm291, %v290, %v285
        %v293 = vadd.s32 %v274, 4294967272
        %v294 = vlaneseq
        %v295 = vshrl.u32 %v294, 7
        %v296 = vsub.s32 %v293, %v295
        %v297 = vrot.slane %v263, %v296
        %vm298 = vcmask 261312
        %v299 = vsel %vm298, %v297, %v292
        %vm300 = vcmask 261120
        %v301 = vsel %vm300, %v299, 0
        %303 = vmatprep.subr.mxu0 0.0
        %304 = vmatpush1.msra.mxu0 %v264
        %305 = vmatprep.subr.mxu0 0.0
        %306 = vmatpush1.msra.mxu0 %v265
        %307 = vmatprep.subr.mxu0 0.0
        %308 = vmatpush1.msra.mxu0 %v266
        %309 = vmatprep.subr.mxu0 0.0
        %310 = vmatpush1.msra.mxu0 %v267
        %311 = vmatprep.subr.mxu0 0.0
        %312 = vmatpush1.msra.mxu0 0.0
        %313 = vmatprep.subr.mxu0 0.0
        %314 = vmatpush1.msra.mxu0 0.0
        %315 = vmatprep.subr.mxu0 0.0
        %316 = vmatpush1.msra.mxu0 0.0
        %317 = vmatprep.subr.mxu0 0.0
        %318 = vmatpush1.msra.mxu0 0.0
        %319 = vmatprep.subr.mxu0 0.0
        %320 = vmatpush1.msra.mxu0 0.0
        %321 = vmatprep.subr.mxu0 0.0
        %322 = vmatpush1.msra.mxu0 0.0
        %323 = vmatprep.subr.mxu0 0.0
        %324 = vmatpush1.msra.mxu0 0.0
        %325 = vmatprep.subr.mxu0 0.0
        %326 = vmatpush1.msra.mxu0 0.0
        %327 = vmatprep.subr.mxu0 0.0
        %328 = vmatpush1.msra.mxu0 0.0
        %329 = vmatprep.subr.mxu0 0.0
        %330 = vmatpush1.msra.mxu0 0.0
        %331 = vmatprep.subr.mxu0 0.0
        %332 = vmatpush1.msra.mxu0 0.0
        %333 = vmatprep.subr.mxu0 0.0
        %334 = vmatpush1.msra.mxu0 0.0
        %335 = vmatprep.subr.mxu0 0.0
        %336 = vmatpush1.msra.mxu0 0.0
        %337 = vmatprep.subr.mxu0 0.0
        %338 = vmatpush1.msra.mxu0 0.0
        %339 = vmatprep.subr.mxu0 0.0
        %340 = vmatpush1.msra.mxu0 0.0
        %341 = vmatprep.subr.mxu0 0.0
        %342 = vmatpush1.msra.mxu0 0.0
        %343 = vmatprep.subr.mxu0 0.0
        %344 = vmatpush1.msra.mxu0 0.0
        %345 = vmatprep.subr.mxu0 0.0
        %346 = vmatpush1.msra.mxu0 0.0
        %347 = vmatprep.subr.mxu0 0.0
        %348 = vmatpush1.msra.mxu0 0.0
        %349 = vmatprep.subr.mxu0 0.0
        %350 = vmatpush1.msra.mxu0 0.0
        %351 = vmatprep.subr.mxu0 0.0
        %352 = vmatpush1.msra.mxu0 0.0
        %353 = vmatprep.subr.mxu0 0.0
        %354 = vmatpush1.msra.mxu0 0.0
        %355 = vmatprep.subr.mxu0 0.0
        %356 = vmatpush1.msra.mxu0 0.0
        %357 = vmatprep.subr.mxu0 0.0
        %358 = vmatpush1.msra.mxu0 0.0
        %359 = vmatprep.subr.mxu0 0.0
        %360 = vmatpush1.msra.mxu0 0.0
        %361 = vmatprep.subr.mxu0 0.0
        %362 = vmatpush1.msra.mxu0 0.0
        %363 = vmatprep.subr.mxu0 0.0
        %364 = vmatpush1.msra.mxu0 0.0
        %365 = vmatprep.subr.mxu0 0.0
        %366 = vmatpush1.msra.mxu0 0.0
        %367 = vmatprep.mubr.f32.mxu0 0.0
        %368 = vmatmul.mubr.f32.gmra.mrb[0].mxu0 %v301
        %v369 = vpop.f32.mrb[0].mxu0
        %v370 = vadd.f32 %v268, %v369
        %v371 = vpop.f32.mrb[0].mxu0
        %372 = vdwg.mxu0
        %v373 = vmax.f32 %v370, 0.0
        %v374 = vld [vmem:[%s3] sm:$0xff]
        %v375 = vld [vmem:[%s4] sm:$0x1]
        %vm376 = vcmask 64512
        %v378 = vsel %vm376, %v373, 0
        %380 = vmatprep.subr.mxu0 0.0
        %381 = vmatpush1.msra.mxu0 %v374
        %382 = vmatprep.subr.mxu0 0.0
        %383 = vmatpush1.msra.mxu0 0.0
        %384 = vmatprep.subr.mxu0 0.0
        %385 = vmatpush1.msra.mxu0 0.0
        %386 = vmatprep.subr.mxu0 0.0
        %387 = vmatpush1.msra.mxu0 0.0
        %388 = vmatprep.subr.mxu0 0.0
        %389 = vmatpush1.msra.mxu0 0.0
        %390 = vmatprep.subr.mxu0 0.0
        %391 = vmatpush1.msra.mxu0 0.0
        %392 = vmatprep.subr.mxu0 0.0
        %393 = vmatpush1.msra.mxu0 0.0
        %394 = vmatprep.subr.mxu0 0.0
        %395 = vmatpush1.msra.mxu0 0.0
        %396 = vmatprep.subr.mxu0 0.0
        %397 = vmatpush1.msra.mxu0 0.0
        %398 = vmatprep.subr.mxu0 0.0
        %399 = vmatpush1.msra.mxu0 0.0
        %400 = vmatprep.subr.mxu0 0.0
        %401 = vmatpush1.msra.mxu0 0.0
        %402 = vmatprep.subr.mxu0 0.0
        %403 = vmatpush1.msra.mxu0 0.0
        %404 = vmatprep.subr.mxu0 0.0
        %405 = vmatpush1.msra.mxu0 0.0
        %406 = vmatprep.subr.mxu0 0.0
        %407 = vmatpush1.msra.mxu0 0.0
        %408 = vmatprep.subr.mxu0 0.0
        %409 = vmatpush1.msra.mxu0 0.0
        %410 = vmatprep.subr.mxu0 0.0
        %411 = vmatpush1.msra.mxu0 0.0
        %412 = vmatprep.subr.mxu0 0.0
        %413 = vmatpush1.msra.mxu0 0.0
        %414 = vmatprep.subr.mxu0 0.0
        %415 = vmatpush1.msra.mxu0 0.0
        %416 = vmatprep.subr.mxu0 0.0
        %417 = vmatpush1.msra.mxu0 0.0
        %418 = vmatprep.subr.mxu0 0.0
        %419 = vmatpush1.msra.mxu0 0.0
        %420 = vmatprep.subr.mxu0 0.0
        %421 = vmatpush1.msra.mxu0 0.0
        %422 = vmatprep.subr.mxu0 0.0
        %423 = vmatpush1.msra.mxu0 0.0
        %424 = vmatprep.subr.mxu0 0.0
        %425 = vmatpush1.msra.mxu0 0.0
        %426 = vmatprep.subr.mxu0 0.0
        %427 = vmatpush1.msra.mxu0 0.0
        %428 = vmatprep.subr.mxu0 0.0
        %429 = vmatpush1.msra.mxu0 0.0
        %430 = vmatprep.subr.mxu0 0.0
        %431 = vmatpush1.msra.mxu0 0.0
        %432 = vmatprep.subr.mxu0 0.0
        %433 = vmatpush1.msra.mxu0 0.0
        %434 = vmatprep.subr.mxu0 0.0
        %435 = vmatpush1.msra.mxu0 0.0
        %436 = vmatprep.subr.mxu0 0.0
        %437 = vmatpush1.msra.mxu0 0.0
        %438 = vmatprep.subr.mxu0 0.0
        %439 = vmatpush1.msra.mxu0 0.0
        %440 = vmatprep.subr.mxu0 0.0
        %441 = vmatpush1.msra.mxu0 0.0
        %442 = vmatprep.subr.mxu0 0.0
        %443 = vmatpush1.msra.mxu0 0.0
        %444 = vmatprep.mubr.f32.mxu0 0.0
        %445 = vmatmul.mubr.f32.gmra.mrb[0].mxu0 %v378
        %v446 = vpop.f32.mrb[0].mxu0
        %v447 = vadd.f32 %v375, %v446
        %v448 = vpop.f32.mrb[0].mxu0
        %449 = vdwg.mxu0
        %v450 = vxor.u32 %v447, 2147483648
        %v451 = vmul.f32 %v450, 1.442695
        %v452 = vpow.pop %v451
        %v453 = vadd.f32 %v452, 1.0
        %v454 = vrcp.pop %v453
        %v455 = vmul.f32 1.0, %v454
        %v456 = vlaneseq
        %v457 = vshrl.u32 %v456, 7
        %v458 = vsub.s32 0, %v457
        %v459 = vrot.slane %v455, %v458
        %461 = vbcast.lane.b32.xlu0 %v459, 256
        %v462 = vpop.permute.xlu0 %461
        %s464 = sor.u32 256, 8
        %465 = vbcast.lane.b32.xlu0 %v459, %s464
        %v466 = vpop.permute.xlu0 %465
        %s468 = sor.u32 256, 16
        %469 = vbcast.lane.b32.xlu0 %v459, %s468
        %v470 = vpop.permute.xlu0 %469
        %s472 = sor.u32 256, 24
        %473 = vbcast.lane.b32.xlu0 %v459, %s472
        %v474 = vpop.permute.xlu0 %473
        %v475 = vmul.f32 %v243, %v462
        %v476 = vmul.f32 %v244, %v466
        %v477 = vmul.f32 %v245, %v470
        %v478 = vmul.f32 %v246, %v474
        %479 = vst.msk [vmem:[%s242] sm:$0xff] %vm247, %v475
        %480 = vst.msk [vmem:[%s242 + $0x8] sm:$0xff] %vm247, %v476
        %481 = vst.msk [vmem:[%s242 + $0x10] sm:$0xff] %vm247, %v477
        %482 = vst.msk [vmem:[%s242 + $0x18] sm:$0xff] %vm247, %v478
        %s483 = sand.u32 %s140, 1
        %s484 = scalar_lea.sflag [#allocation4], %s483
        %s485 = sand.u32 %s140, 1
        %s486 = smul.addr %s485, 32
        %s487 = scalar_lea.vmem [#allocation5], %s486
        // Predicated region
        $region45: #{tpu_custom_call.1} parent=39 // pred_check
          %p488 = pneg %p150
        $region46: #{tpu_custom_call.1} parent=39 // pred_check_branch
          %490 = sbr.rel (%p488) target = $region48
        $region47: #{tpu_custom_call.1} parent=39 // pred_region
          %s492 = ssub.s32 512, 512
          %493 = vsyncadd %s484, %s492
          %s494 = smul.addr %s22, 4
          %s495 = smul.addr %s494, 128
          %s496 = scalar_lea.hbm %s5, %s495
          %s497 = sshll.u32 %s487, 4
          %s498 = int_to_ptr.vmem [resolvable:$true] %s497
          %503 = dma.vmem_to_hbm [thread:$0]  %s498, 512, %s496, %s484, 128, 128, 8
        $region48: #{tpu_custom_call.1} parent=39 // pred_fallthru
          _
      $region40: #{tpu_custom_call.1} parent=5 // pred_fallthru
        _
      %p504 = scmp.le.s32.totalorder 2, %s17
      // Predicated region
      $region49: #{tpu_custom_call.1} parent=5 // pred_check
        %p505 = pneg %p504
      $region50: #{tpu_custom_call.1} parent=5 // pred_check_branch
        %507 = sbr.rel (%p505) target = $region52
      $region51: #{tpu_custom_call.1} parent=5 // pred_region
        %s508 = ssub.s32 %s17, 2
        // Predicated region
        $region53: #{tpu_custom_call.1} parent=51 // pred_check
          %p509 = pneg %p156
        $region54: #{tpu_custom_call.1} parent=51 // pred_check_branch
          %511 = sbr.rel (%p509) target = $region56
        $region55: #{tpu_custom_call.1} parent=51 // pred_region
          %s512 = sand.u32 %s141, 1
          %s513 = scalar_lea.sflag [#allocation4], %s512
          %s514 = sand.u32 %s141, 1
          %s515 = smul.addr %s514, 32
          %s516 = scalar_lea.vmem [#allocation5], %s515
          %517 = dma.done %s513, 512
        $region56: #{tpu_custom_call.1} parent=51 // pred_fallthru
          _
      $region52: #{tpu_custom_call.1} parent=5 // pred_fallthru
        _
    $region6: #{tpu_custom_call.1} parent=1 // loop_footer
      %s21 = sadd.s32 1, %s17
    $region7: #{tpu_custom_call.1} parent=1 // loop_footer_branch
      %16 = sbr.rel target = $region3
    $region8: #{tpu_custom_call.1} parent=1 // loop_exit
      _
    %518 = vsyncpa [#allocation3], 1
    %s519 = scalar_lea.sflag [#allocation3], 1
    %520 = vsyncpa %s519, 1
    %521 = vsyncpa [#allocation4], 1
    %s522 = scalar_lea.sflag [#allocation4], 1
    %523 = vsyncpa %s522, 1

</llo_original>
